<compile_context>
chip_gen: v6e
topology: v6e:2x2x1
jax: 0.10.0
libtpu: 0.0.40
codegen_flags: <defaults>
</compile_context>

<pallas_src>
import functools

import jax
import jax.numpy as jnp
from jax import lax
from jax.experimental import pallas as pl
from jax.experimental.pallas import tpu as pltpu


_VMEM_WORKING_BUDGET = 20 * 1024 * 1024   # sizing target for one pipelined tile
_VMEM_LIMIT_BYTES = 48 * 1024 * 1024      # scoped VMEM cap (fits v7x's 64 MiB physical)


def _pick_tile_s(hw, c, itemsize):
    """Pick a spatial tile (multiple of 128) that keeps the pipeline in VMEM."""
    hw_padded = max(128, pl.cdiv(hw, 128) * 128)
    # ~8 live f32 (C, TILE_S) temporaries + 2x double-buffered input tile.
    per_col_bytes = c * (8 * 4 + 2 * itemsize) + 64
    tile = _VMEM_WORKING_BUDGET // per_col_bytes
    tile = max(128, min(4096, (tile // 128) * 128))
    return min(tile, hw_padded)


def _lms_body(x_ref, lb_ref, *, num_classes, lam, ignore_index, hw, tile_s):
    """Shared per-tile math.  Tile layout: classes on sublanes, pixels on lanes."""
    x = x_ref[0].astype(jnp.float32)            # (C, S) — cast in-kernel (bf16 passthrough)
    lb = lb_ref[0]                              # (1, S) int32
    c, s = x.shape

    # Valid = not ignore_index AND inside the real (un-padded) spatial extent.
    col = pl.program_id(1) * tile_s + lax.broadcasted_iota(jnp.int32, (1, s), 1)
    valid = jnp.logical_and(lb != ignore_index, col < hw)        # (1, S)
    lb_eff = jnp.where(valid, lb, 0)

    cls = lax.broadcasted_iota(jnp.int32, (c, s), 0)
    is_true = cls == lb_eff                                      # one-hot mask (C, S)

    # --- one shared exp pass feeds both CE and the margin softmax ---
    m = jnp.max(x, axis=0, keepdims=True)                        # (1, S)
    e = jnp.exp(x - m)                                           # (C, S), single EUP pass
    s_all = jnp.sum(e, axis=0, keepdims=True)                    # (1, S)
    x_true = jnp.sum(jnp.where(is_true, x, 0.0), axis=0, keepdims=True)
    e_true = jnp.exp(x_true - m)                                 # bit-identical to e at the true row

    # Cross-entropy (reduction='none').
    ce = m + jnp.log(s_all) - x_true                             # (1, S)

    # Large-margin term: softmax over the non-true classes (|logits| << 1e6
    # assumption of the PyTorch trick becomes an exact "drop the true class").
    # s2 underflows to 0 only when the true logit beats all others by >~87.
    s2 = jnp.maximum(s_all - e_true, 1e-30)
    inv_s2 = pl.reciprocal(s2, approx=True)                      # EUP slot
    inv_s2 = inv_s2 * (2.0 - s2 * inv_s2)                        # one Newton step (per-column, cheap)
    log_s2 = jnp.log(s2)
    q = jnp.where(is_true, 0.0, e * inv_s2)
    log_q = jnp.where(is_true, 0.0, x - m - log_s2)
    coeff = 1.0 / (num_classes - 1.0)
    mg = jnp.sum((q - coeff) * log_q, axis=0, keepdims=True) * (lam * 0.5)

    loss = jnp.where(valid, ce + mg, 0.0)                        # (1, S); masked pixels -> 0
    return loss, valid.astype(jnp.float32)


def _lms_kernel_partial(x_ref, lb_ref, loss_ref, valid_ref, **statics):
    """mean/sum path: one lane-dense (1, 128) partial-sum row per block."""
    loss, validf = _lms_body(x_ref, lb_ref, **statics)
    ps_loss = jnp.sum(loss, axis=1, keepdims=True)               # (1, 1)
    ps_valid = jnp.sum(validf, axis=1, keepdims=True)
    loss_ref[...] = jnp.broadcast_to(ps_loss.reshape(1, 1, 1, 1), loss_ref.shape)
    valid_ref[...] = jnp.broadcast_to(ps_valid.reshape(1, 1, 1, 1), valid_ref.shape)


def _lms_kernel_px(x_ref, lb_ref, loss_ref, **statics):
    """'none' path: lane-dense per-pixel loss (0 at ignored pixels)."""
    loss, _ = _lms_body(x_ref, lb_ref, **statics)
    loss_ref[0] = loss


def large_margin_softmax_v1(logits_nchw, label_nhw, *, lam=0.3, ignore_index=255,
                            reduction='mean', tile_s=None):
    n, c, h, w = logits_nchw.shape
    hw = h * w
    # Free reshapes only — keep NCHW so classes sit on sublanes, pixels on lanes.
    x = logits_nchw.reshape(n, c, hw)                 # keep source dtype (bf16 OK)
    lb = label_nhw.reshape(n, 1, hw).astype(jnp.int32)

    if tile_s is None:
        tile_s = _pick_tile_s(hw, c, jnp.dtype(x.dtype).itemsize)
    else:
        tile_s = max(128, pl.cdiv(int(tile_s), 128) * 128)
    n_sblk = pl.cdiv(hw, tile_s)

    statics = dict(num_classes=c, lam=float(lam), ignore_index=int(ignore_index),
                   hw=hw, tile_s=tile_s)
    in_specs = [pl.BlockSpec((1, c, tile_s), lambda i, j: (i, 0, j)),
                pl.BlockSpec((1, 1, tile_s), lambda i, j: (i, 0, j))]
    cparams = pltpu.CompilerParams(
        dimension_semantics=("parallel", "parallel"),  # keep parallel: v7x megacore sharding
        vmem_limit_bytes=_VMEM_LIMIT_BYTES)

    if reduction in ('mean', 'sum'):
        # In-kernel reduction: emit per-block partial sums only.
        loss_p, valid_p = pl.pallas_call(
            functools.partial(_lms_kernel_partial, **statics),
            out_shape=(jax.ShapeDtypeStruct((n, n_sblk, 1, 128), jnp.float32),
                       jax.ShapeDtypeStruct((n, n_sblk, 1, 128), jnp.float32)),
            grid_spec=pltpu.PrefetchScalarGridSpec(
                num_scalar_prefetch=0, grid=(n, n_sblk),
                in_specs=in_specs,
                out_specs=(pl.BlockSpec((1, 1, 1, 128), lambda i, j: (i, j, 0, 0)),
                           pl.BlockSpec((1, 1, 1, 128), lambda i, j: (i, j, 0, 0)))),
            compiler_params=cparams,
        )(x, lb)
        total = jnp.sum(loss_p[..., 0])
        if reduction == 'sum':
            return total
        # Matches PyTorch: NaN if every pixel is ignore_index.
        return total / jnp.sum(valid_p[..., 0])

    # reduction == 'none': per-pixel loss in NHW layout; ignored pixels are 0.
    # TODO(synk): PyTorch 'none' drops ignored entries (data-dependent shape); no
    # static-shape equivalent, so the full map with zeros at ignored pixels is returned.
    loss_px = pl.pallas_call(
        functools.partial(_lms_kernel_px, **statics),
        out_shape=jax.ShapeDtypeStruct((n, 1, hw), jnp.float32),
        grid_spec=pltpu.PrefetchScalarGridSpec(
            num_scalar_prefetch=0, grid=(n, n_sblk),
            in_specs=in_specs,
            out_specs=pl.BlockSpec((1, 1, tile_s), lambda i, j: (i, 0, j))),
        compiler_params=cparams,
    )(x, lb)
    return loss_px.reshape(n, h, w)


def _reference_jax(logits_nchw, label_nhw, lam=0.3, ignore_index=255):
    """Pure-JAX reference mirroring the PyTorch module; returns per-pixel loss and valid mask."""
    logits = logits_nchw.astype(jnp.float32)
    num_classes = logits.shape[1]
    coeff = 1.0 / (num_classes - 1.0)
    mask = label_nhw == ignore_index
    lb = jnp.where(mask, 0, label_nhw).astype(jnp.int32)
    idx = jax.nn.one_hot(lb, num_classes, axis=1, dtype=jnp.float32)
    lgts = logits - idx * 1.0e6
    q = jax.nn.softmax(lgts, axis=1) * (1.0 - idx)
    log_q = jax.nn.log_softmax(lgts, axis=1) * (1.0 - idx)
    mg = ((q - coeff) * log_q * (lam / 2.0) * (1.0 - idx)).sum(axis=1)
    log_p = jax.nn.log_softmax(logits, axis=1)
    ce = -jnp.take_along_axis(log_p, lb[:, None], axis=1)[:, 0]
    validf = (~mask).astype(jnp.float32)
    return (ce + mg) * validf, validf


if __name__ == "__main__":
    key = jax.random.PRNGKey(0)

    def check(n, c, h, w, salt):
        k1, k2, k3 = jax.random.split(jax.random.fold_in(key, salt), 3)
        logits = jax.random.normal(k1, (n, c, h, w), dtype=jnp.float32)
        label = jax.random.randint(k2, (n, h, w), 0, c, dtype=jnp.int32)
        label = jnp.where(jax.random.uniform(k3, (n, h, w)) < 0.1, 255, label)

        loss_px_ref, valid_ref = _reference_jax(logits, label, lam=0.3, ignore_index=255)
        ref_mean = jnp.sum(loss_px_ref) / jnp.sum(valid_ref)
        ref_sum = jnp.sum(loss_px_ref)

        out_mean = jax.block_until_ready(
            large_margin_softmax_v1(logits, label, lam=0.3, ignore_index=255,
                                    reduction='mean'))
        out_sum = jax.block_until_ready(
            large_margin_softmax_v1(logits, label, lam=0.3, ignore_index=255,
                                    reduction='sum'))
        out_none = jax.block_until_ready(
            large_margin_softmax_v1(logits, label, lam=0.3, ignore_index=255,
                                    reduction='none'))

        # Tolerances account for the approx-EUP reciprocal (Newton-refined).
        assert jnp.allclose(out_mean, ref_mean, rtol=1e-3, atol=1e-3), (out_mean, ref_mean)
        assert jnp.allclose(out_sum, ref_sum, rtol=1e-3, atol=1e-2), (out_sum, ref_sum)
        assert out_none.shape == (n, h, w)
        assert jnp.allclose(out_none, loss_px_ref, rtol=1e-3, atol=1e-3), (
            float(jnp.max(jnp.abs(out_none - loss_px_ref))))

    check(2, 8, 16, 16, salt=0)    # H*W multiple of 128
    check(2, 5, 10, 10, salt=1)    # ragged H*W (< one tile), odd class count
    print("KERNEL_OK")
</pallas_src>

<mosaic_0001>
module attributes {stable_mosaic.version = 11 : i64} {
  func.func @_lms_kernel_partial(%arg0: i32, %arg1: i32, %arg2: memref<1x8x256xf32, #tpu.memory_space<vmem>>, %arg3: memref<1x1x256xi32, #tpu.memory_space<vmem>>, %arg4: memref<1x1x1x128xf32, #tpu.memory_space<vmem>>, %arg5: memref<1x1x1x128xf32, #tpu.memory_space<vmem>>) attributes {dimension_semantics = [#tpu.dimension_semantics<parallel>, #tpu.dimension_semantics<parallel>], iteration_bounds = array<i64: 2, 1>, scalar_prefetch = 0 : i64, scratch_operands = 0 : i64, tpu.core_type = #tpu.core_type<tc>, window_params = [{transform_indices = @transform_0, window_bounds = array<i64: 1, 8, 256>}, {transform_indices = @transform_1, window_bounds = array<i64: 1, 1, 256>}, {transform_indices = @transform_2, window_bounds = array<i64: 1, 1, 1, 128>}, {transform_indices = @transform_3, window_bounds = array<i64: 1, 1, 1, 128>}]} {
    %c0 = arith.constant 0 : index
    %c0_0 = arith.constant 0 : index
    %c0_1 = arith.constant 0 : index
    %0 = vector.load %arg2[%c0, %c0_0, %c0_1] : memref<1x8x256xf32, #tpu.memory_space<vmem>>, vector<1x8x256xf32>
    %1 = vector.shape_cast %0 : vector<1x8x256xf32> to vector<8x256xf32>
    %c0_2 = arith.constant 0 : index
    %c0_3 = arith.constant 0 : index
    %c0_4 = arith.constant 0 : index
    %2 = vector.load %arg3[%c0_2, %c0_3, %c0_4] : memref<1x1x256xi32, #tpu.memory_space<vmem>>, vector<1x1x256xi32>
    %3 = vector.shape_cast %2 : vector<1x1x256xi32> to vector<1x256xi32>
    %c256_i32 = arith.constant 256 : i32
    %4 = arith.muli %arg1, %c256_i32 : i32
    %5 = tpu.iota {dimensions = array<i32: 1>} : vector<1x256xi32>
    %6 = vector.broadcast %4 : i32 to vector<1x256xi32>
    %7 = arith.addi %6, %5 : vector<1x256xi32>
    %c255_i32 = arith.constant 255 : i32
    %8 = vector.broadcast %c255_i32 : i32 to vector<1x256xi32>
    %9 = arith.cmpi ne, %3, %8 : vector<1x256xi32>
    %c256_i32_5 = arith.constant 256 : i32
    %10 = vector.broadcast %c256_i32_5 : i32 to vector<1x256xi32>
    %11 = arith.cmpi slt, %7, %10 : vector<1x256xi32>
    %12 = arith.andi %9, %11 : vector<1x256xi1>
    %c0_i32 = arith.constant 0 : i32
    %13 = vector.broadcast %c0_i32 : i32 to vector<1x256xi32>
    %14 = arith.select %12, %3, %13 : vector<1x256xi1>, vector<1x256xi32>
    %15 = tpu.iota {dimensions = array<i32: 0>} : vector<8x256xi32>
    %16 = vector.broadcast %14 : vector<1x256xi32> to vector<8x256xi32>
    %17 = arith.cmpi eq, %15, %16 : vector<8x256xi32>
    %cst = arith.constant dense<0xFF800000> : vector<256xf32>
    %18 = vector.multi_reduction <maximumf>, %1, %cst [0] : vector<8x256xf32> to vector<256xf32>
    %19 = vector.shape_cast %18 : vector<256xf32> to vector<1x256xf32>
    %20 = vector.broadcast %19 : vector<1x256xf32> to vector<8x256xf32>
    %21 = arith.subf %1, %20 : vector<8x256xf32>
    %22 = math.exp %21 : vector<8x256xf32>
    %cst_6 = arith.constant dense<0.000000e+00> : vector<256xf32>
    %23 = vector.multi_reduction <add>, %22, %cst_6 [0] : vector<8x256xf32> to vector<256xf32>
    %24 = vector.shape_cast %23 : vector<256xf32> to vector<1x256xf32>
    %cst_7 = arith.constant 0.000000e+00 : f32
    %25 = vector.broadcast %cst_7 : f32 to vector<8x256xf32>
    %26 = arith.select %17, %1, %25 : vector<8x256xi1>, vector<8x256xf32>
    %cst_8 = arith.constant dense<0.000000e+00> : vector<256xf32>
    %27 = vector.multi_reduction <add>, %26, %cst_8 [0] : vector<8x256xf32> to vector<256xf32>
    %28 = vector.shape_cast %27 : vector<256xf32> to vector<1x256xf32>
    %29 = arith.subf %28, %19 : vector<1x256xf32>
    %30 = math.exp %29 : vector<1x256xf32>
    %31 = math.log %24 : vector<1x256xf32>
    %32 = arith.addf %19, %31 : vector<1x256xf32>
    %33 = arith.subf %32, %28 : vector<1x256xf32>
    %34 = arith.subf %24, %30 : vector<1x256xf32>
    %cst_9 = arith.constant 1.000000e-30 : f32
    %35 = vector.broadcast %cst_9 : f32 to vector<1x256xf32>
    %36 = arith.maximumf %34, %35 : vector<1x256xf32>
    %37 = tpu.reciprocal %36 {approx = true} : vector<1x256xf32> -> vector<1x256xf32>
    %38 = arith.mulf %36, %37 : vector<1x256xf32>
    %cst_10 = arith.constant 2.000000e+00 : f32
    %39 = vector.broadcast %cst_10 : f32 to vector<1x256xf32>
    %40 = arith.subf %39, %38 : vector<1x256xf32>
    %41 = arith.mulf %37, %40 : vector<1x256xf32>
    %42 = math.log %36 : vector<1x256xf32>
    %43 = vector.broadcast %41 : vector<1x256xf32> to vector<8x256xf32>
    %44 = arith.mulf %22, %43 : vector<8x256xf32>
    %cst_11 = arith.constant 0.000000e+00 : f32
    %45 = vector.broadcast %cst_11 : f32 to vector<8x256xf32>
    %46 = arith.select %17, %45, %44 : vector<8x256xi1>, vector<8x256xf32>
    %47 = vector.broadcast %19 : vector<1x256xf32> to vector<8x256xf32>
    %48 = arith.subf %1, %47 : vector<8x256xf32>
    %49 = vector.broadcast %42 : vector<1x256xf32> to vector<8x256xf32>
    %50 = arith.subf %48, %49 : vector<8x256xf32>
    %cst_12 = arith.constant 0.000000e+00 : f32
    %51 = vector.broadcast %cst_12 : f32 to vector<8x256xf32>
    %52 = arith.select %17, %51, %50 : vector<8x256xi1>, vector<8x256xf32>
    %cst_13 = arith.constant 0.142857149 : f32
    %53 = vector.broadcast %cst_13 : f32 to vector<8x256xf32>
    %54 = arith.subf %46, %53 : vector<8x256xf32>
    %55 = arith.mulf %54, %52 : vector<8x256xf32>
    %cst_14 = arith.constant dense<0.000000e+00> : vector<256xf32>
    %56 = vector.multi_reduction <add>, %55, %cst_14 [0] : vector<8x256xf32> to vector<256xf32>
    %57 = vector.shape_cast %56 : vector<256xf32> to vector<1x256xf32>
    %cst_15 = arith.constant 1.500000e-01 : f32
    %58 = vector.broadcast %cst_15 : f32 to vector<1x256xf32>
    %59 = arith.mulf %57, %58 : vector<1x256xf32>
    %60 = arith.addf %33, %59 : vector<1x256xf32>
    %cst_16 = arith.constant 0.000000e+00 : f32
    %61 = vector.broadcast %cst_16 : f32 to vector<1x256xf32>
    %62 = arith.select %12, %60, %61 : vector<1x256xi1>, vector<1x256xf32>
    %63 = arith.extui %12 : vector<1x256xi1> to vector<1x256xi32>
    %64 = arith.sitofp %63 : vector<1x256xi32> to vector<1x256xf32>
    %cst_17 = arith.constant dense<0.000000e+00> : vector<1xf32>
    %65 = vector.multi_reduction <add>, %62, %cst_17 [1] : vector<1x256xf32> to vector<1xf32>
    %66 = vector.shape_cast %65 : vector<1xf32> to vector<1x1xf32>
    %cst_18 = arith.constant dense<0.000000e+00> : vector<1xf32>
    %67 = vector.multi_reduction <add>, %64, %cst_18 [1] : vector<1x256xf32> to vector<1xf32>
    %68 = vector.shape_cast %67 : vector<1xf32> to vector<1x1xf32>
    %69 = vector.shape_cast %66 : vector<1x1xf32> to vector<1x1x1x1xf32>
    %70 = vector.shape_cast %69 : vector<1x1x1x1xf32> to vector<1x1x1x1xf32>
    %71 = vector.broadcast %70 : vector<1x1x1x1xf32> to vector<1x1x1x128xf32>
    %c0_19 = arith.constant 0 : index
    %c0_20 = arith.constant 0 : index
    %c0_21 = arith.constant 0 : index
    %c0_22 = arith.constant 0 : index
    %72 = vector.load %arg4[%c0_19, %c0_20, %c0_21, %c0_22] : memref<1x1x1x128xf32, #tpu.memory_space<vmem>>, vector<1x1x1x128xf32>
    tpu.vector_store %arg4[%c0_19, %c0_20, %c0_21, %c0_22], %71 {strides = array<i32>} : memref<1x1x1x128xf32, #tpu.memory_space<vmem>>, vector<1x1x1x128xf32>,
    %73 = vector.shape_cast %68 : vector<1x1xf32> to vector<1x1x1x1xf32>
    %74 = vector.shape_cast %73 : vector<1x1x1x1xf32> to vector<1x1x1x1xf32>
    %75 = vector.broadcast %74 : vector<1x1x1x1xf32> to vector<1x1x1x128xf32>
    %c0_23 = arith.constant 0 : index
    %c0_24 = arith.constant 0 : index
    %c0_25 = arith.constant 0 : index
    %c0_26 = arith.constant 0 : index
    %76 = vector.load %arg5[%c0_23, %c0_24, %c0_25, %c0_26] : memref<1x1x1x128xf32, #tpu.memory_space<vmem>>, vector<1x1x1x128xf32>
    tpu.vector_store %arg5[%c0_23, %c0_24, %c0_25, %c0_26], %75 {strides = array<i32>} : memref<1x1x1x128xf32, #tpu.memory_space<vmem>>, vector<1x1x1x128xf32>,
    return
  }
  func.func @transform_0(%arg0: i32, %arg1: i32) -> (i32, i32, i32) {
    %c0_i32 = arith.constant 0 : i32
    %c0_i32_0 = arith.constant 0 : i32
    return %arg0, %c0_i32, %arg1 : i32, i32, i32
  }
  func.func @transform_1(%arg0: i32, %arg1: i32) -> (i32, i32, i32) {
    %c0_i32 = arith.constant 0 : i32
    %c0_i32_0 = arith.constant 0 : i32
    return %arg0, %c0_i32, %arg1 : i32, i32, i32
  }
  func.func @transform_2(%arg0: i32, %arg1: i32) -> (i32, i32, i32, i32) {
    %c0_i32 = arith.constant 0 : i32
    %c0_i32_0 = arith.constant 0 : i32
    %c0_i32_1 = arith.constant 0 : i32
    return %arg0, %arg1, %c0_i32, %c0_i32_0 : i32, i32, i32, i32
  }
  func.func @transform_3(%arg0: i32, %arg1: i32) -> (i32, i32, i32, i32) {
    %c0_i32 = arith.constant 0 : i32
    %c0_i32_0 = arith.constant 0 : i32
    %c0_i32_1 = arith.constant 0 : i32
    return %arg0, %arg1, %c0_i32, %c0_i32_0 : i32, i32, i32, i32
  }
}

</mosaic_0001>

<llo_original>
// kernel: tpu_custom_call.1
$region0: #{tpu_custom_call.1}
  #allocation0 [shape = 'u32[]', space=smem, size = 0x4, offset = 0x4, fixed_abs, tag = 'smem constant byte address 0x4 - core index']
  #allocation1 [shape = 'u32[144,128]{1,0:T(1,128)}', space=vmem, size = 0x12000, scoped, tag = 'internal scratch']
  %s0 = inlined_call_operand.hbm [shape: f32[2,8,256], index: 0, kind: input, shape index: {}]
  %s1 = inlined_call_operand.hbm [shape: s32[2,1,256], index: 1, kind: input, shape index: {}]
  %s2 = inlined_call_operand.hbm [shape: f32[2,1,1,128], index: 2, kind: output, shape index: {0}]
  %s3 = inlined_call_operand.hbm [shape: f32[2,1,1,128], index: 3, kind: output, shape index: {1}]
  %4 = xla_tuple %s2, %s3
  %s5 = sld [smem:[#allocation0]]
  $region57: #{tpu_custom_call.1} parent=0
    _
  %s7 = ssub.s32 1, %s5
  %s8 = scalar_select 0, %s7, %s5
  $region1: #{tpu_custom_call.1} parent=0
    #allocation2 [shape = 'u8[16384]{0}', space=vmem, size = 0x4000, scoped, tag = 'input window, operand 0']
    #allocation3 [shape = 's32[2]{0}', space=sflag, size = 0x8, scoped, tag = 'scoped memory for tpu_custom_call.1']
    #allocation4 [shape = 's32[2]{0}', space=sflag, size = 0x8, scoped, tag = 'scoped memory for tpu_custom_call.1']
    #allocation5 [shape = 'u8[2048]{0}', space=vmem, size = 0x800, scoped, tag = 'input window, operand 1']
    #allocation6 [shape = 's32[2]{0}', space=sflag, size = 0x8, scoped, tag = 'scoped memory for tpu_custom_call.1']
    #allocation7 [shape = 'u8[1024]{0}', space=vmem, size = 0x400, scoped, tag = 'output window, operand 0']
    #allocation8 [shape = 'u8[1024]{0}', space=vmem, size = 0x400, scoped, tag = 'output window, operand 1']
    #allocation9 [shape = 's32[2]{0}', space=sflag, size = 0x8, scoped, tag = 'scoped memory for tpu_custom_call.1']
    %9 = vsyncpa [#allocation3], 0
    %s10 = scalar_lea.sflag [#allocation3], 1
    %11 = vsyncpa %s10, 0
    %12 = vsyncpa [#allocation6], 0
    %s13 = scalar_lea.sflag [#allocation6], 1
    %14 = vsyncpa %s13, 0
    %15 = vsyncpa [#allocation4], 0
    %s16 = scalar_lea.sflag [#allocation4], 1
    %17 = vsyncpa %s16, 0
    %18 = vsyncpa [#allocation9], 0
    %s19 = scalar_lea.sflag [#allocation9], 1
    %20 = vsyncpa %s19, 0
    loop: start=0, step=1, limit=4
    $region2: #{tpu_custom_call.1} parent=1 // loop_pre_header
      _
    $region3: #{tpu_custom_call.1} parent=1 // loop_header
      %s22 = sphi 0, %s26
      %p23 = scmp.ge.s32.totalorder %s22, 4
      %s29 = sphi 0, %s41
      %s30 = sphi 0, %s37
      %s31 = sphi 0, %s29
      %s32 = sphi 0, %s30
      %s33 = sphi 0, %s31
      %s34 = sphi 0, %s32
      %s46 = sphi 0, %s48
      %s49 = sphi 0, %s46
      %s50 = sphi 0, %s49
      %s66 = sphi 0, %s50
      %s74 = sphi 0, %s76
      %s77 = sphi 0, %s74
      %s78 = sphi 0, %s77
      %s94 = sphi 0, %s78
      %s102 = sphi 0, %s104
      %s105 = sphi 0, %s102
      %s106 = sphi 0, %s105
      %s122 = sphi 0, %s106
      %s130 = sphi 0, %s132
      %s133 = sphi 0, %s130
      %s134 = sphi 0, %s133
      %s150 = sphi 0, %s134
    $region4: #{tpu_custom_call.1} parent=1 // loop_header_branch
      %25 = sbr.rel (%p23) target = $region8
    $region5: #{tpu_custom_call.1} parent=1 // loop_body
      %s27 = ssub.s32 %s22, 1
      %s28 = ssub.s32 %s22, 2
      %s35 = sadd.s32 1, %s30
      %p36 = scmp.ge.s32.totalorder %s35, 1
      %s37 = scalar_select %p36, 0, %s35
      %s38 = sadd.s32 1, %s29
      %s39 = scalar_select %p36, %s38, %s29
      %p40 = scmp.ge.s32.totalorder %s39, 2
      %s41 = scalar_select %p40, 0, %s39
      %s42 = ssub.s32 %s29, %s41
      %s43 = ssub.s32 %s30, %s37
      %s44 = sor.u32 %s42, %s43
      %p45 = scmp.eq.s32.totalorder %s44, 0
      %s47 = sadd.s32 %s46, 1
      %s48 = scalar_select %p45, %s46, %s47
      %p51 = pneg %p45
      %p52 = scmp.eq.s32.totalorder %s22, 1
      %p53 = por %p51, %p52
      %p54 = scmp.ne.s32.totalorder %s46, %s49
      %p55 = scmp.eq.s32.totalorder %s22, 0
      %p56 = por %p54, %p55
      %p57 = scmp.ne.s32.totalorder %s46, %s49
      %p58 = scmp.eq.s32.totalorder %s27, 1
      %p59 = por %p57, %p58
      %p60 = scmp.ne.s32.totalorder %s49, %s50
      %p61 = scmp.eq.s32.totalorder %s27, 0
      %p62 = por %p60, %p61
      %p63 = scmp.ne.s32.totalorder %s49, %s50
      %p64 = scmp.eq.s32.totalorder %s28, 1
      %p65 = por %p63, %p64
      %p67 = scmp.ne.s32.totalorder %s50, %s66
      %p68 = scmp.eq.s32.totalorder %s28, 0
      %p69 = por %p67, %p68
      %s70 = ssub.s32 %s29, %s41
      %s71 = ssub.s32 %s30, %s37
      %s72 = sor.u32 %s70, %s71
      %p73 = scmp.eq.s32.totalorder %s72, 0
      %s75 = sadd.s32 %s74, 1
      %s76 = scalar_select %p73, %s74, %s75
      %p79 = pneg %p73
      %p80 = scmp.eq.s32.totalorder %s22, 1
      %p81 = por %p79, %p80
      %p82 = scmp.ne.s32.totalorder %s74, %s77
      %p83 = scmp.eq.s32.totalorder %s22, 0
      %p84 = por %p82, %p83
      %p85 = scmp.ne.s32.totalorder %s74, %s77
      %p86 = scmp.eq.s32.totalorder %s27, 1
      %p87 = por %p85, %p86
      %p88 = scmp.ne.s32.totalorder %s77, %s78
      %p89 = scmp.eq.s32.totalorder %s27, 0
      %p90 = por %p88, %p89
      %p91 = scmp.ne.s32.totalorder %s77, %s78
      %p92 = scmp.eq.s32.totalorder %s28, 1
      %p93 = por %p91, %p92
      %p95 = scmp.ne.s32.totalorder %s78, %s94
      %p96 = scmp.eq.s32.totalorder %s28, 0
      %p97 = por %p95, %p96
      %s98 = ssub.s32 %s29, %s41
      %s99 = ssub.s32 %s30, %s37
      %s100 = sor.u32 %s98, %s99
      %p101 = scmp.eq.s32.totalorder %s100, 0
      %s103 = sadd.s32 %s102, 1
      %s104 = scalar_select %p101, %s102, %s103
      %p107 = pneg %p101
      %p108 = scmp.eq.s32.totalorder %s22, 1
      %p109 = por %p107, %p108
      %p110 = scmp.ne.s32.totalorder %s102, %s105
      %p111 = scmp.eq.s32.totalorder %s22, 0
      %p112 = por %p110, %p111
      %p113 = scmp.ne.s32.totalorder %s102, %s105
      %p114 = scmp.eq.s32.totalorder %s27, 1
      %p115 = por %p113, %p114
      %p116 = scmp.ne.s32.totalorder %s105, %s106
      %p117 = scmp.eq.s32.totalorder %s27, 0
      %p118 = por %p116, %p117
      %p119 = scmp.ne.s32.totalorder %s105, %s106
      %p120 = scmp.eq.s32.totalorder %s28, 1
      %p121 = por %p119, %p120
      %p123 = scmp.ne.s32.totalorder %s106, %s122
      %p124 = scmp.eq.s32.totalorder %s28, 0
      %p125 = por %p123, %p124
      %s126 = ssub.s32 %s29, %s41
      %s127 = ssub.s32 %s30, %s37
      %s128 = sor.u32 %s126, %s127
      %p129 = scmp.eq.s32.totalorder %s128, 0
      %s131 = sadd.s32 %s130, 1
      %s132 = scalar_select %p129, %s130, %s131
      %p135 = pneg %p129
      %p136 = scmp.eq.s32.totalorder %s22, 1
      %p137 = por %p135, %p136
      %p138 = scmp.ne.s32.totalorder %s130, %s133
      %p139 = scmp.eq.s32.totalorder %s22, 0
      %p140 = por %p138, %p139
      %p141 = scmp.ne.s32.totalorder %s130, %s133
      %p142 = scmp.eq.s32.totalorder %s27, 1
      %p143 = por %p141, %p142
      %p144 = scmp.ne.s32.totalorder %s133, %s134
      %p145 = scmp.eq.s32.totalorder %s27, 0
      %p146 = por %p144, %p145
      %p147 = scmp.ne.s32.totalorder %s133, %s134
      %p148 = scmp.eq.s32.totalorder %s28, 1
      %p149 = por %p147, %p148
      %p151 = scmp.ne.s32.totalorder %s134, %s150
      %p152 = scmp.eq.s32.totalorder %s28, 0
      %p153 = por %p151, %p152
      %p154 = scmp.le.s32.totalorder 1, %s22
      %p155 = scmp.lt.s32.totalorder %s22, 3
      %p156 = pnand %p154, %p155
      %p157 = pneg %p156
      // Predicated region
      $region9: #{tpu_custom_call.1} parent=5 // pred_check
        _
      $region10: #{tpu_custom_call.1} parent=5 // pred_check_branch
        %159 = sbr.rel (%p156) target = $region12
      $region11: #{tpu_custom_call.1} parent=5 // pred_region
        %s160 = ssub.s32 %s22, 1
      $region12: #{tpu_custom_call.1} parent=5 // pred_fallthru
        _
      %p161 = scmp.lt.s32.totalorder %s22, 2
      // Predicated region
      $region13: #{tpu_custom_call.1} parent=5 // pred_check
        %p162 = pneg %p161
      $region14: #{tpu_custom_call.1} parent=5 // pred_check_branch
        %164 = sbr.rel (%p162) target = $region16
      $region15: #{tpu_custom_call.1} parent=5 // pred_region
        // Predicated region
        $region17: #{tpu_custom_call.1} parent=15 // pred_check
          %p165 = pneg %p56
        $region18: #{tpu_custom_call.1} parent=15 // pred_check_branch
          %167 = sbr.rel (%p165) target = $region20
        $region19: #{tpu_custom_call.1} parent=15 // pred_region
          %s168 = sand.u32 %s46, 1
          %s169 = scalar_lea.sflag [#allocation3], %s168
          %s170 = sand.u32 %s46, 1
          %s171 = smul.addr %s170, 16
          %s172 = scalar_lea.vmem [#allocation2], %s171
          %s173 = smul.u32 2, %s30
          %s175 = ssub.s32 256, 256
          %176 = vsyncadd %s169, %s175
          %s177 = smul.addr %s29, 2
          %s178 = sadd.s32 %s173, %s177
          %s179 = smul.addr %s178, 128
          %s180 = scalar_lea.hbm %s0, %s179
          %s182 = sshll.u32 %s172, 4
          %s183 = int_to_ptr.vmem [resolvable:$true] %s182
          %185 = dma.hbm_to_vmem [thread:$0]  %s180, 256, %s183, %s169
        $region20: #{tpu_custom_call.1} parent=15 // pred_fallthru
          _
        // Predicated region
        $region21: #{tpu_custom_call.1} parent=15 // pred_check
          %p186 = pneg %p84
        $region22: #{tpu_custom_call.1} parent=15 // pred_check_branch
          %188 = sbr.rel (%p186) target = $region24
        $region23: #{tpu_custom_call.1} parent=15 // pred_region
          %s189 = sand.u32 %s74, 1
          %s190 = scalar_lea.sflag [#allocation6], %s189
          %s191 = sand.u32 %s74, 1
          %s192 = smul.addr %s191, 2
          %s193 = scalar_lea.vmem [#allocation5], %s192
          %s194 = smul.u32 2, %s30
          %s196 = ssub.s32 32, 32
          %197 = vsyncadd %s190, %s196
          %s198 = smul.addr %s29, 2
          %s199 = sadd.s32 %s194, %s198
          %s200 = smul.addr %s199, 16
          %s201 = scalar_lea.hbm %s1, %s200
          %s203 = sshll.u32 %s193, 4
          %s204 = int_to_ptr.vmem [resolvable:$true] %s203
          %206 = dma.hbm_to_vmem [thread:$0]  %s201, 32, %s204, %s190
        $region24: #{tpu_custom_call.1} parent=15 // pred_fallthru
          _
      $region16: #{tpu_custom_call.1} parent=5 // pred_fallthru
        _
      %p207 = scmp.le.s32.totalorder 1, %s22
      %p208 = scmp.lt.s32.totalorder %s22, 3
      %p209 = pnand %p207, %p208
      %p210 = pneg %p209
      // Predicated region
      $region25: #{tpu_custom_call.1} parent=5 // pred_check
        _
      $region26: #{tpu_custom_call.1} parent=5 // pred_check_branch
        %212 = sbr.rel (%p209) target = $region28
      $region27: #{tpu_custom_call.1} parent=5 // pred_region
        %s213 = ssub.s32 %s22, 1
        %s214 = sand.u32 %s49, 1
        %s215 = scalar_lea.sflag [#allocation3], %s214
        %s216 = sand.u32 %s49, 1
        %s217 = smul.addr %s216, 16
        %s218 = scalar_lea.vmem [#allocation2], %s217
        // Predicated region
        $region29: #{tpu_custom_call.1} parent=27 // pred_check
          %p219 = pneg %p62
        $region30: #{tpu_custom_call.1} parent=27 // pred_check_branch
          %221 = sbr.rel (%p219) target = $region32
        $region31: #{tpu_custom_call.1} parent=27 // pred_region
          %222 = dma.done %s215, 256
        $region32: #{tpu_custom_call.1} parent=27 // pred_fallthru
          _
        %s223 = sand.u32 %s77, 1
        %s224 = scalar_lea.sflag [#allocation6], %s223
        %s225 = sand.u32 %s77, 1
        %s226 = smul.addr %s225, 2
        %s227 = scalar_lea.vmem [#allocation5], %s226
        // Predicated region
        $region33: #{tpu_custom_call.1} parent=27 // pred_check
          %p228 = pneg %p90
        $region34: #{tpu_custom_call.1} parent=27 // pred_check_branch
          %230 = sbr.rel (%p228) target = $region36
        $region35: #{tpu_custom_call.1} parent=27 // pred_region
          %231 = dma.done %s224, 32
        $region36: #{tpu_custom_call.1} parent=27 // pred_fallthru
          _
        %s232 = sand.u32 %s49, 1
        %s233 = scalar_lea.sflag [#allocation3], %s232
        %s234 = sand.u32 %s49, 1
        %s235 = smul.addr %s234, 16
        %s236 = scalar_lea.vmem [#allocation2], %s235
        %p237 = pneg %p62
        %p238 = pneg %p59
        %s239 = sand.u32 %s77, 1
        %s240 = scalar_lea.sflag [#allocation6], %s239
        %s241 = sand.u32 %s77, 1
        %s242 = smul.addr %s241, 2
        %s243 = scalar_lea.vmem [#allocation5], %s242
        %p244 = pneg %p90
        %p245 = pneg %p87
        %p246 = pneg %p118
        %p247 = pneg %p115
        %s248 = sand.u32 %s105, 1
        %s249 = scalar_lea.sflag [#allocation4], %s248
        %s250 = sand.u32 %s105, 1
        %s251 = scalar_lea.vmem [#allocation7], %s250
        %p252 = pneg %p146
        %p253 = pneg %p143
        %s254 = sand.u32 %s133, 1
        %s255 = scalar_lea.sflag [#allocation9], %s254
        %s256 = sand.u32 %s133, 1
        %s257 = scalar_lea.vmem [#allocation8], %s256
        %s258 = smul.u32 2, %s32
        %s259 = smul.u32 2, %s32
        %v260 = vld [vmem:[%s218] sm:$0xff]
        %v261 = vld [vmem:[%s218 + $0x8] sm:$0xff]
        %v262 = vld [vmem:[%s227] sm:$0x3]
        %s263 = smul.u32 %s32, 256
        %v264 = vlaneseq
        %v265 = vand.u32 %v264, 127
        %v266 = vadd.s32 %v265, 128
        %v267 = vstv %s263
        %v268 = vadd.s32 %v267, %v265
        %v269 = vadd.s32 %v267, %v266
        %vm270 = vcmp.ne.s32.totalorder %v262, 255
        %vm271 = vcmp.lt.s32.totalorder %v268, 256
        %vm272 = vcmp.lt.s32.totalorder %v269, 256
        %v273 = vsel %vm271, 1, 0
        %v274 = vsel %vm272, 1, 0
        %v275 = vcombine.low %v273, %v274
        %v277 = vunpack.c.l.s4 1966171168
        %v278 = vunpack.c.0.s8 %v277
        %v279 = vlaneseq
        %v280 = vshrl.u32 %v279, 7
        %v281 = vsub.s32 %v278, %v280
        %v282 = vrot.slane %v275, %v281
        %v284 = vunpack.c.l.s4 1966171168
        %v285 = vunpack.c.0.s8 %v284
        %v286 = vlaneseq
        %v287 = vshrl.u32 %v286, 7
        %v288 = vsub.s32 %v285, %v287
        %v289 = vrot.slane %v282, %v288
        %vm290 = vcmp.ne.s32.totalorder %v289, 0
        %vm291 = vmand %vm270, %vm290
        %v292 = vsel %vm291, %v262, 0
        %v293 = vlaneseq
        %v294 = vshrl.u32 %v293, 7
        %v295 = vlaneseq
        %v296 = vshrl.u32 %v295, 7
        %v297 = vsub.s32 0, %v296
        %v298 = vrot.slane %v292, %v297
        %v299 = vlaneseq
        %v300 = vshrl.u32 %v299, 7
        %v301 = vsub.s32 1, %v300
        %v302 = vrot.slane %v292, %v301
        %vm303 = vcmp.eq.s32.totalorder %v294, %v298
        %vm304 = vcmp.eq.s32.totalorder %v294, %v302
        %v305 = vrot.slane %v260, 4
        %v306 = vmax.f32 %v260, %v305
        %v307 = vrot.slane %v306, 2
        %v308 = vmax.f32 %v306, %v307
        %v309 = vrot.slane %v308, 1
        %v310 = vmax.f32 %v308, %v309
        %v311 = vrot.slane %v261, 4
        %v312 = vmax.f32 %v261, %v311
        %v313 = vrot.slane %v312, 2
        %v314 = vmax.f32 %v312, %v313
        %v315 = vrot.slane %v314, 1
        %v316 = vmax.f32 %v314, %v315
        %v317 = vsub.f32 %v260, %v310
        %v318 = vsub.f32 %v261, %v316
        %v319 = vmul.f32 %v317, 1.442695
        %v320 = vpow.pop %v319
        %v321 = vmul.f32 %v318, 1.442695
        %v322 = vpow.pop %v321
        %v323 = vrot.slane %v320, 4
        %v324 = vadd.f32 %v320, %v323
        %v325 = vrot.slane %v324, 2
        %v326 = vadd.f32 %v324, %v325
        %v327 = vrot.slane %v326, 1
        %v328 = vadd.f32 %v326, %v327
        %v329 = vrot.slane %v322, 4
        %v330 = vadd.f32 %v322, %v329
        %v331 = vrot.slane %v330, 2
        %v332 = vadd.f32 %v330, %v331
        %v333 = vrot.slane %v332, 1
        %v334 = vadd.f32 %v332, %v333
        %v335 = vsel %vm303, %v260, 0.0
        %v336 = vsel %vm304, %v261, 0.0
        %v337 = vrot.slane %v335, 4
        %v338 = vadd.f32 %v335, %v337
        %v339 = vrot.slane %v338, 2
        %v340 = vadd.f32 %v338, %v339
        %v341 = vrot.slane %v340, 1
        %v342 = vadd.f32 %v340, %v341
        %v343 = vrot.slane %v336, 4
        %v344 = vadd.f32 %v336, %v343
        %v345 = vrot.slane %v344, 2
        %v346 = vadd.f32 %v344, %v345
        %v347 = vrot.slane %v346, 1
        %v348 = vadd.f32 %v346, %v347
        %v349 = vsub.f32 %v342, %v310
        %v350 = vsub.f32 %v348, %v316
        %v351 = vmul.f32 %v349, 1.442695
        %v352 = vpow.pop %v351
        %v353 = vmul.f32 %v350, 1.442695
        %v354 = vpow.pop %v353
        %v355 = vlog2.pop %v328
        %v356 = vmul.f32 %v355, 0.6931472
        %v357 = vlog2.pop %v334
        %v358 = vmul.f32 %v357, 0.6931472
        %v359 = vadd.f32 %v310, %v356
        %v360 = vadd.f32 %v316, %v358
        %v361 = vsub.f32 %v359, %v342
        %v362 = vsub.f32 %v360, %v348
        %v363 = vsub.f32 %v328, %v352
        %v364 = vsub.f32 %v334, %v354
        %v365 = vmax.f32 %v363, 1e-30
        %v366 = vmax.f32 %v364, 1e-30
        %v367 = vrcp.pop %v365
        %v368 = vrcp.pop %v366
        %v369 = vmul.f32 %v365, %v367
        %v370 = vmul.f32 %v366, %v368
        %v371 = vsub.f32 2.0, %v369
        %v372 = vsub.f32 2.0, %v370
        %v373 = vmul.f32 %v367, %v371
        %v374 = vmul.f32 %v368, %v372
        %v375 = vlog2.pop %v365
        %v376 = vmul.f32 %v375, 0.6931472
        %v377 = vlog2.pop %v366
        %v378 = vmul.f32 %v377, 0.6931472
        %v379 = vmul.f32 %v320, %v373
        %v380 = vmul.f32 %v322, %v374
        %v381 = vsel %vm303, 0.0, %v379
        %v382 = vsel %vm304, 0.0, %v380
        %v383 = vsub.f32 %v317, %v376
        %v384 = vsub.f32 %v318, %v378
        %v385 = vsel %vm303, 0.0, %v383
        %v386 = vsel %vm304, 0.0, %v384
        %v387 = vsub.f32 %v381, 0.14285715
        %v388 = vsub.f32 %v382, 0.14285715
        %v389 = vmul.f32 %v387, %v385
        %v390 = vmul.f32 %v388, %v386
        %v391 = vrot.slane %v389, 4
        %v392 = vadd.f32 %v389, %v391
        %v393 = vrot.slane %v392, 2
        %v394 = vadd.f32 %v392, %v393
        %v395 = vrot.slane %v394, 1
        %v396 = vadd.f32 %v394, %v395
        %v397 = vrot.slane %v390, 4
        %v398 = vadd.f32 %v390, %v397
        %v399 = vrot.slane %v398, 2
        %v400 = vadd.f32 %v398, %v399
        %v401 = vrot.slane %v400, 1
        %v402 = vadd.f32 %v400, %v401
        %v403 = vmul.f32 %v396, 0.15
        %v404 = vmul.f32 %v402, 0.15
        %v405 = vadd.f32 %v361, %v403
        %v406 = vadd.f32 %v362, %v404
        %v409 = vcombine.low %v405, %v406
        %v411 = vunpack.c.l.s4 1966171168
        %v412 = vunpack.c.0.s8 %v411
        %v413 = vlaneseq
        %v414 = vshrl.u32 %v413, 7
        %v415 = vsub.s32 %v412, %v414
        %v416 = vrot.slane %v409, %v415
        %v418 = vunpack.c.l.s4 1966171168
        %v419 = vunpack.c.0.s8 %v418
        %v420 = vlaneseq
        %v421 = vshrl.u32 %v420, 7
        %v422 = vsub.s32 %v419, %v421
        %v423 = vrot.slane %v416, %v422
        %v425 = vsel %vm291, %v423, 0.0
        %v426 = vsel %vm291, 1, 0
        %v427 = vcvt.s32.f32 %v426
        %v429 = vlaneseq
        %v430 = vshrl.u32 %v429, 7
        %v431 = vsub.s32 0, %v430
        %v432 = vrot.slane %v425, %v431
        %v433 = vlaneseq
        %v434 = vshrl.u32 %v433, 7
        %v435 = vsub.s32 1, %v434
        %v436 = vrot.slane %v425, %v435
        %vm439 = vcmask 1040384
        %v440 = vsel %vm439, %v432, 0.0
        %v441 = vsel %vm439, %v436, 0.0
        %v442 = vadd.f32 %v440, %v441
        %443 = vadd.xlane.f32.xlu0 %v442
        %v444 = vpop.xlane.xlu0 %443
        %v446 = vlaneseq
        %v447 = vshrl.u32 %v446, 7
        %v448 = vsub.s32 0, %v447
        %v449 = vrot.slane %v427, %v448
        %v450 = vlaneseq
        %v451 = vshrl.u32 %v450, 7
        %v452 = vsub.s32 1, %v451
        %v453 = vrot.slane %v427, %v452
        %v456 = vsel %vm439, %v449, 0.0
        %v457 = vsel %vm439, %v453, 0.0
        %v458 = vadd.f32 %v456, %v457
        %459 = vadd.xlane.f32.xlu0 %v458
        %v460 = vpop.xlane.xlu0 %459
        %461 = vst [vmem:[%s251] sm:$0x1] %v444
        %462 = vst [vmem:[%s257] sm:$0x1] %v460
        %s463 = sand.u32 %s105, 1
        %s464 = scalar_lea.sflag [#allocation4], %s463
        %s465 = sand.u32 %s105, 1
        %s466 = scalar_lea.vmem [#allocation7], %s465
        %s467 = sand.u32 %s133, 1
        %s468 = scalar_lea.sflag [#allocation9], %s467
        %s469 = sand.u32 %s133, 1
        %s470 = scalar_lea.vmem [#allocation8], %s469
        // Predicated region
        $region37: #{tpu_custom_call.1} parent=27 // pred_check
          %p471 = pneg %p115
        $region38: #{tpu_custom_call.1} parent=27 // pred_check_branch
          %473 = sbr.rel (%p471) target = $region40
        $region39: #{tpu_custom_call.1} parent=27 // pred_region
          %s475 = ssub.s32 16, 16
          %476 = vsyncadd %s464, %s475
          %s477 = sadd.s32 %s32, %s31
          %s478 = smul.addr %s477, 16
          %s479 = scalar_lea.hbm %s2, %s478
          %s481 = sshll.u32 %s466, 4
          %s482 = int_to_ptr.vmem [resolvable:$true] %s481
          %484 = dma.vmem_to_hbm [thread:$0]  %s482, 16, %s479, %s464
        $region40: #{tpu_custom_call.1} parent=27 // pred_fallthru
          _
        // Predicated region
        $region41: #{tpu_custom_call.1} parent=27 // pred_check
          %p485 = pneg %p143
        $region42: #{tpu_custom_call.1} parent=27 // pred_check_branch
          %487 = sbr.rel (%p485) target = $region44
        $region43: #{tpu_custom_call.1} parent=27 // pred_region
          %s489 = ssub.s32 16, 16
          %490 = vsyncadd %s468, %s489
          %s491 = sadd.s32 %s32, %s31
          %s492 = smul.addr %s491, 16
          %s493 = scalar_lea.hbm %s3, %s492
          %s495 = sshll.u32 %s470, 4
          %s496 = int_to_ptr.vmem [resolvable:$true] %s495
          %498 = dma.vmem_to_hbm [thread:$0]  %s496, 16, %s493, %s468
        $region44: #{tpu_custom_call.1} parent=27 // pred_fallthru
          _
      $region28: #{tpu_custom_call.1} parent=5 // pred_fallthru
        _
      %p499 = scmp.le.s32.totalorder 2, %s22
      // Predicated region
      $region45: #{tpu_custom_call.1} parent=5 // pred_check
        %p500 = pneg %p499
      $region46: #{tpu_custom_call.1} parent=5 // pred_check_branch
        %502 = sbr.rel (%p500) target = $region48
      $region47: #{tpu_custom_call.1} parent=5 // pred_region
        %s503 = ssub.s32 %s22, 2
        // Predicated region
        $region49: #{tpu_custom_call.1} parent=47 // pred_check
          %p504 = pneg %p121
        $region50: #{tpu_custom_call.1} parent=47 // pred_check_branch
          %506 = sbr.rel (%p504) target = $region52
        $region51: #{tpu_custom_call.1} parent=47 // pred_region
          %s507 = sand.u32 %s106, 1
          %s508 = scalar_lea.sflag [#allocation4], %s507
          %s509 = sand.u32 %s106, 1
          %s510 = scalar_lea.vmem [#allocation7], %s509
          %511 = dma.done %s508, 16
        $region52: #{tpu_custom_call.1} parent=47 // pred_fallthru
          _
        // Predicated region
        $region53: #{tpu_custom_call.1} parent=47 // pred_check
          %p512 = pneg %p149
        $region54: #{tpu_custom_call.1} parent=47 // pred_check_branch
          %514 = sbr.rel (%p512) target = $region56
        $region55: #{tpu_custom_call.1} parent=47 // pred_region
          %s515 = sand.u32 %s134, 1
          %s516 = scalar_lea.sflag [#allocation9], %s515
          %s517 = sand.u32 %s134, 1
          %s518 = scalar_lea.vmem [#allocation8], %s517
          %519 = dma.done %s516, 16
        $region56: #{tpu_custom_call.1} parent=47 // pred_fallthru
          _
      $region48: #{tpu_custom_call.1} parent=5 // pred_fallthru
        _
    $region6: #{tpu_custom_call.1} parent=1 // loop_footer
      %s26 = sadd.s32 1, %s22
    $region7: #{tpu_custom_call.1} parent=1 // loop_footer_branch
      %21 = sbr.rel target = $region3
    $region8: #{tpu_custom_call.1} parent=1 // loop_exit
      _
    %520 = vsyncpa [#allocation3], 1
    %s521 = scalar_lea.sflag [#allocation3], 1
    %522 = vsyncpa %s521, 1
    %523 = vsyncpa [#allocation6], 1
    %s524 = scalar_lea.sflag [#allocation6], 1
    %525 = vsyncpa %s524, 1
    %526 = vsyncpa [#allocation4], 1
    %s527 = scalar_lea.sflag [#allocation4], 1
    %528 = vsyncpa %s527, 1
    %529 = vsyncpa [#allocation9], 1
    %s530 = scalar_lea.sflag [#allocation9], 1
    %531 = vsyncpa %s530, 1

</llo_original>
